<compile_context>
chip_gen: v6e
topology: v6e:2x2x1
jax: 0.10.0
libtpu: 0.0.40
codegen_flags: <defaults>
</compile_context>

<pallas_src>
import functools
import math

import jax
import jax.numpy as jnp
from jax.experimental import pallas as pl
from jax.experimental.pallas import tpu as pltpu


# ----------------------------------------------------------------------------
# Fused kernel: 2-channel LSTM recurrence (unrolled over T) + tag head.
# ----------------------------------------------------------------------------
def fused_kernel(x_ref, wih_ref, whh_ref, bias_ref, wtag_ref, btag_ref,
                 out_ref, h_all_ref, *, T, B, Hc, Tg):
    H = 2 * Hc          # concatenated hidden width (static | dyn)
    G = 8 * Hc          # fused gate width (= 128 lanes at Hc = 16)

    whh = whh_ref[...]                                      # (H, G) bf16, loop-invariant

    # Hoisted input projection + fused bias: ONE MXU call for all T steps,
    # entirely off the serial recurrent critical path.
    xw_all = (jnp.dot(x_ref[...], wih_ref[...],
                      preferred_element_type=jnp.float32)
              + bias_ref[...])                              # (T*B, G) f32, time-major

    # Single-tanh activation masks: sigmoid(x) = 0.5*tanh(0.5*x) + 0.5.
    # pre/post hoisted as full (B, G) arrays (no per-iteration broadcast).
    col = jax.lax.broadcasted_iota(jnp.int32, (B, G), 1)
    is_g = (col >= 4 * Hc) & (col < 6 * Hc)                 # lanes of the g-gate
    pre = jnp.where(is_g, jnp.float32(1.0), jnp.float32(0.5))      # also the post scale
    post_b = jnp.where(is_g, jnp.float32(0.0), jnp.float32(0.5))

    h = jnp.zeros((B, H), jnp.float32)                      # [h_s | h_d]
    c = jnp.zeros((B, H), jnp.float32)                      # [c_s | c_d]

    # Fully unrolled time loop (T small & static); h/c stay vreg-resident.
    # TODO(synk): if T grows beyond ~32-64, switch to lax.fori_loop(..., unroll=4-8).
    # TODO(synk): optional v5e/v6e tweak: pin W_hh in the MXU via pltpu.matmul_push_rhs
    # (verify with a bundle dump that weight pushes actually repeat before committing).
    for t in range(T):
        gates = (jnp.dot(h.astype(jnp.bfloat16), whh,
                         preferred_element_type=jnp.float32)
                 + xw_all[t * B:(t + 1) * B, :])            # (B, G) f32

        # One EUP tanh for the whole 128-lane gates vreg (sigmoid via identity).
        act = jnp.tanh(gates * pre) * pre + post_b
        i_g = act[:, 0 * H:1 * H]                           # [i_s | i_d]
        f_g = act[:, 1 * H:2 * H]                           # [f_s | f_d]
        g_g = act[:, 2 * H:3 * H]                           # [g_s | g_d]
        o_g = act[:, 3 * H:4 * H]                           # [o_s | o_d]

        c = f_g * c + i_g * g_g
        h = o_g * jnp.tanh(c)

        # One (B, H) chunk store per step, time-major; does not feed the recurrence,
        # so it stays off the serial critical path.
        h_all_ref[pl.ds(t * B, B), :] = h

    # ---- tag head: Linear (BN scale pre-folded into W_tag) + ReLU + log_softmax ----
    y = (jnp.dot(h_all_ref[...].astype(jnp.bfloat16), wtag_ref[...],
                 preferred_element_type=jnp.float32)
         + btag_ref[...])                                   # (T*B, Tg_pad) f32
    y = jnp.maximum(y, 0.0)                                 # ReLU
    lane = jax.lax.broadcasted_iota(jnp.int32, y.shape, 1)
    y = jnp.where(lane < Tg, y, jnp.float32(-1e30))         # mask padded output lanes
    m = jnp.max(y, axis=-1, keepdims=True)
    lse = m + jnp.log(jnp.sum(jnp.exp(y - m), axis=-1, keepdims=True))
    out_ref[...] = (y - lse).astype(out_ref.dtype)          # log_softmax (lane-dense store)


def lstm2ch_fused_call(x_flat, wih_f, whh_f, bias_f, w_tag_pad, b_tag_pad,
                       *, T, B, tagset):
    """x_flat: (T*B, 2E) bf16 time-major; wih_f: (2E, 8Hc); whh_f: (2Hc, 8Hc);
    bias_f: (1, 8Hc); w_tag_pad: (2Hc*? ...) see shapes below."""
    N, E2 = x_flat.shape
    G = wih_f.shape[1]
    Hc = G // 8
    H = 2 * Hc
    Tg_pad = w_tag_pad.shape[1]

    kernel = functools.partial(fused_kernel, T=T, B=B, Hc=Hc, Tg=tagset)
    grid_spec = pltpu.PrefetchScalarGridSpec(
        num_scalar_prefetch=0,
        grid=(1,),
        in_specs=[
            pl.BlockSpec((N, E2), lambda i: (0, 0)),         # x, lane-dense 2-D slab
            pl.BlockSpec((E2, G), lambda i: (0, 0)),         # W_ih fused
            pl.BlockSpec((H, G), lambda i: (0, 0)),          # W_hh fused
            pl.BlockSpec((1, G), lambda i: (0, 0)),          # fused bias
            pl.BlockSpec((H, Tg_pad), lambda i: (0, 0)),     # W_tag^T (BN folded, padded)
            pl.BlockSpec((1, Tg_pad), lambda i: (0, 0)),     # b_tag (padded)
        ],
        out_specs=pl.BlockSpec((N, Tg_pad), lambda i: (0, 0)),
        scratch_shapes=[pltpu.VMEM((N, H), jnp.float32)],    # time-major h history
    )
    return pl.pallas_call(
        kernel,
        out_shape=jax.ShapeDtypeStruct((N, Tg_pad), jnp.float32),
        grid_spec=grid_spec,
        compiler_params=pltpu.CompilerParams(dimension_semantics=("arbitrary",)),
    )(x_flat, wih_f, whh_f, bias_f, w_tag_pad, b_tag_pad)


# ----------------------------------------------------------------------------
# Weight fusion: block-diagonal, gate-grouped layout for the 2-channel LSTM.
# ----------------------------------------------------------------------------
def fuse_lstm_weights(w_ih_s, w_hh_s, b_s, w_ih_d, w_hh_d, b_d):
    """Per-channel torch-layout params: w_ih (4Hc, E), w_hh (4Hc, Hc), b (4Hc,),
    PyTorch gate order (i, f, g, o). Returns fused (2E, 8Hc), (2Hc, 8Hc), (1, 8Hc)
    with gate columns grouped as [i_s i_d | f_s f_d | g_s g_d | o_s o_d]."""
    Hc = w_hh_s.shape[1]
    E = w_ih_s.shape[1]
    zE = jnp.zeros((E, Hc), jnp.float32)
    zH = jnp.zeros((Hc, Hc), jnp.float32)
    cols_ih, cols_hh, bias = [], [], []
    for k in range(4):
        s = slice(k * Hc, (k + 1) * Hc)
        cols_ih += [jnp.concatenate([w_ih_s[s].T, zE], axis=0),   # static-channel block
                    jnp.concatenate([zE, w_ih_d[s].T], axis=0)]   # dynamic-channel block
        cols_hh += [jnp.concatenate([w_hh_s[s].T, zH], axis=0),
                    jnp.concatenate([zH, w_hh_d[s].T], axis=0)]
        bias += [b_s[s], b_d[s]]
    w_ih_f = jnp.concatenate(cols_ih, axis=1)                     # (2E, 8Hc)
    w_hh_f = jnp.concatenate(cols_hh, axis=1)                     # (2Hc, 8Hc)
    bias_f = jnp.concatenate(bias)[None, :]                       # (1, 8Hc)
    return (w_ih_f.astype(jnp.bfloat16), w_hh_f.astype(jnp.bfloat16),
            bias_f.astype(jnp.float32))


# ----------------------------------------------------------------------------
# Full forward (only the tiny embedding gather + layout prep stay in XLA).
# ----------------------------------------------------------------------------
def gather_renorm(emb, tokens, max_norm):
    """nn.Embedding(max_norm=...): renorm only the gathered rows (O(B*T*E))."""
    rows = emb[tokens]                                            # (B, T, E)
    n = jnp.linalg.norm(rows, axis=-1, keepdims=True)
    scale = jnp.minimum(1.0, max_norm / jnp.maximum(n, 1e-7))
    return rows * scale


def lstm2ch_forward(tokens, params):
    # nn.Dropout layers are identity in eval/inference mode.
    # TODO(synk): BatchNorm2d folded with eval-mode default running stats; train-mode
    # batch statistics are not implemented.
    # TODO(synk): embedding gather/renorm kept as (tiny) XLA ops; could be moved
    # in-kernel with scalar-prefetched token ids + a manual DMA gather.
    B, T = tokens.shape
    Tg = params["tagset_size"]

    xs = params["w2v"][tokens]                                    # (B, T, E) static emb
    xd = gather_renorm(params["emb_dyn"], tokens, params["embedding_norm"])
    x = jnp.concatenate([xs, xd], axis=-1)                        # (B, T, 2E)
    # Lane-dense 2-D slab, time-major rows (row = t*B + b), bf16 MXU operand.
    x_flat = jnp.transpose(x, (1, 0, 2)).reshape(T * B, -1).astype(jnp.bfloat16)

    out_pad = lstm2ch_fused_call(x_flat, params["wih_fused"], params["whh_fused"],
                                 params["bias_fused"], params["w_tag_pad"],
                                 params["b_tag_pad"], T=T, B=B, tagset=Tg)

    out = out_pad[:, :Tg]                                         # drop padded lanes
    # time-major (t*B+b) -> batch-major (b*T+t): matches torch batch_first
    # cat/unsqueeze/hidden2tag followed by view(-1, tagset_size).
    return out.reshape(T, B, Tg).transpose(1, 0, 2).reshape(B * T, Tg)


# ----------------------------------------------------------------------------
# Deterministic parameter construction.
# ----------------------------------------------------------------------------
def make_params(key, vocab, E, hidden_dim, tagset, embedding_norm=10.0):
    Hc = hidden_dim // 2
    ks = jax.random.split(key, 12)
    u = lambda k, shape, lim: jax.random.uniform(k, shape, jnp.float32, -lim, lim)
    lim_lstm = 1.0 / math.sqrt(Hc)
    lim_lin = 1.0 / math.sqrt(hidden_dim)

    # Per-channel torch-layout LSTM parameters (gate order i, f, g, o).
    w_ih_s = u(ks[2], (4 * Hc, E), lim_lstm)
    w_hh_s = u(ks[3], (4 * Hc, Hc), lim_lstm)
    b_s = u(ks[4], (4 * Hc,), lim_lstm) + u(ks[5], (4 * Hc,), lim_lstm)   # b_ih + b_hh
    w_ih_d = u(ks[6], (4 * Hc, E), lim_lstm)
    w_hh_d = u(ks[7], (4 * Hc, Hc), lim_lstm)
    b_d = u(ks[8], (4 * Hc,), lim_lstm) + u(ks[9], (4 * Hc,), lim_lstm)

    wih_f, whh_f, bias_f = fuse_lstm_weights(w_ih_s, w_hh_s, b_s,
                                             w_ih_d, w_hh_d, b_d)

    # Tag head: fold BN2d(1) eval scale into W_tag; pad output lanes to a multiple
    # of 128 so the kernel's final store is lane-dense.
    bn_scale = 1.0 / math.sqrt(1.0 + 1e-5)
    w_tag = u(ks[10], (tagset, hidden_dim), lim_lin)              # torch Linear layout
    b_tag = u(ks[11], (tagset,), lim_lin)
    tg_pad = ((tagset + 127) // 128) * 128
    w_tag_t = w_tag.T * bn_scale                                  # (hidden_dim, tagset)
    w_tag_pad = jnp.zeros((hidden_dim, tg_pad), jnp.float32).at[:, :tagset].set(w_tag_t)
    b_tag_pad = jnp.zeros((1, tg_pad), jnp.float32).at[0, :tagset].set(b_tag)

    return {
        "w2v": jax.random.normal(ks[0], (vocab, E), jnp.float32) * 0.1,   # frozen w2v
        "emb_dyn": jax.random.normal(ks[1], (vocab, E), jnp.float32),
        "embedding_norm": embedding_norm,
        "tagset_size": tagset,
        "wih_fused": wih_f,                                       # (2E, 8Hc)  bf16
        "whh_fused": whh_f,                                       # (2Hc, 8Hc) bf16
        "bias_fused": bias_f,                                     # (1, 8Hc)   f32
        "w_tag_pad": w_tag_pad.astype(jnp.bfloat16),              # (2Hc, 128) bf16, BN folded
        "b_tag_pad": b_tag_pad,                                   # (1, 128)   f32
    }


if __name__ == "__main__":
    key = jax.random.PRNGKey(0)
    B, T = 2, 8
    vocab, E = 50, 32
    hidden_dim, tagset = 32, 8

    pkey, tkey = jax.random.split(key)
    params = make_params(pkey, vocab, E, hidden_dim, tagset)
    tokens = jax.random.randint(tkey, (B, T), 0, vocab, dtype=jnp.int32)

    scores = lstm2ch_forward(tokens, params)                      # (B*T, tagset) log-probs
    scores = jax.block_until_ready(scores)

    assert scores.shape == (B * T, tagset)
    assert bool(jnp.all(jnp.isfinite(scores)))
    # rows of log_softmax should exponentiate-sum to ~1
    assert bool(jnp.allclose(jnp.sum(jnp.exp(scores), axis=-1), 1.0, atol=1e-4))
    print("KERNEL_OK")
</pallas_src>

<mosaic_0001>
module attributes {stable_mosaic.version = 11 : i64} {
  func.func @fused_kernel(%arg0: i32, %arg1: memref<16x64xbf16, #tpu.memory_space<vmem>>, %arg2: memref<64x128xbf16, #tpu.memory_space<vmem>>, %arg3: memref<32x128xbf16, #tpu.memory_space<vmem>>, %arg4: memref<1x128xf32, #tpu.memory_space<vmem>>, %arg5: memref<32x128xbf16, #tpu.memory_space<vmem>>, %arg6: memref<1x128xf32, #tpu.memory_space<vmem>>, %arg7: memref<16x128xf32, #tpu.memory_space<vmem>>, %arg8: memref<16x32xf32, #tpu.memory_space<vmem>>) attributes {dimension_semantics = [#tpu.dimension_semantics<arbitrary>], iteration_bounds = array<i64: 1>, scalar_prefetch = 0 : i64, scratch_operands = 1 : i64, tpu.core_type = #tpu.core_type<tc>, window_params = [{pipeline_mode = #tpu.pipeline_mode<synchronous>, transform_indices = @transform_0, window_bounds = array<i64: 16, 64>}, {pipeline_mode = #tpu.pipeline_mode<synchronous>, transform_indices = @transform_1, window_bounds = array<i64: 64, 128>}, {pipeline_mode = #tpu.pipeline_mode<synchronous>, transform_indices = @transform_2, window_bounds = array<i64: 32, 128>}, {pipeline_mode = #tpu.pipeline_mode<synchronous>, transform_indices = @transform_3, window_bounds = array<i64: 1, 128>}, {pipeline_mode = #tpu.pipeline_mode<synchronous>, transform_indices = @transform_4, window_bounds = array<i64: 32, 128>}, {pipeline_mode = #tpu.pipeline_mode<synchronous>, transform_indices = @transform_5, window_bounds = array<i64: 1, 128>}, {pipeline_mode = #tpu.pipeline_mode<synchronous>, transform_indices = @transform_6, window_bounds = array<i64: 16, 128>}]} {
    %c0 = arith.constant 0 : index
    %c0_0 = arith.constant 0 : index
    %0 = vector.load %arg3[%c0, %c0_0] : memref<32x128xbf16, #tpu.memory_space<vmem>>, vector<32x128xbf16>
    %c0_1 = arith.constant 0 : index
    %c0_2 = arith.constant 0 : index
    %1 = vector.load %arg1[%c0_1, %c0_2] : memref<16x64xbf16, #tpu.memory_space<vmem>>, vector<16x64xbf16>
    %c0_3 = arith.constant 0 : index
    %c0_4 = arith.constant 0 : index
    %2 = vector.load %arg2[%c0_3, %c0_4] : memref<64x128xbf16, #tpu.memory_space<vmem>>, vector<64x128xbf16>
    %cst = arith.constant dense<0.000000e+00> : vector<16x128xf32>
    %3 = tpu.matmul %1, %2, %cst {dimension_numbers = #tpu.dot_dimension_numbers<[1], [0], [0], [1], [0, 0, 1, 1], [], []>} : vector<16x64xbf16>, vector<64x128xbf16>, vector<16x128xf32> -> vector<16x128xf32>
    %c0_5 = arith.constant 0 : index
    %c0_6 = arith.constant 0 : index
    %4 = vector.load %arg4[%c0_5, %c0_6] : memref<1x128xf32, #tpu.memory_space<vmem>>, vector<1x128xf32>
    %5 = vector.broadcast %4 : vector<1x128xf32> to vector<16x128xf32>
    %6 = arith.addf %3, %5 : vector<16x128xf32>
    %7 = tpu.iota {dimensions = array<i32: 1>} : vector<2x128xi32>
    %c64_i32 = arith.constant 64 : i32
    %8 = vector.broadcast %c64_i32 : i32 to vector<2x128xi32>
    %9 = arith.cmpi sge, %7, %8 : vector<2x128xi32>
    %c96_i32 = arith.constant 96 : i32
    %10 = vector.broadcast %c96_i32 : i32 to vector<2x128xi32>
    %11 = arith.cmpi slt, %7, %10 : vector<2x128xi32>
    %12 = arith.andi %9, %11 : vector<2x128xi1>
    %cst_7 = arith.constant 1.000000e+00 : f32
    %cst_8 = arith.constant 5.000000e-01 : f32
    %13 = vector.broadcast %cst_7 : f32 to vector<2x128xf32>
    %14 = vector.broadcast %cst_8 : f32 to vector<2x128xf32>
    %15 = arith.select %12, %13, %14 : vector<2x128xi1>, vector<2x128xf32>
    %cst_9 = arith.constant 0.000000e+00 : f32
    %cst_10 = arith.constant 5.000000e-01 : f32
    %16 = vector.broadcast %cst_9 : f32 to vector<2x128xf32>
    %17 = vector.broadcast %cst_10 : f32 to vector<2x128xf32>
    %18 = arith.select %12, %16, %17 : vector<2x128xi1>, vector<2x128xf32>
    %cst_11 = arith.constant 0.000000e+00 : f32
    %19 = vector.broadcast %cst_11 : f32 to vector<2x32xf32>
    %cst_12 = arith.constant 0.000000e+00 : f32
    %20 = vector.broadcast %cst_12 : f32 to vector<2x32xf32>
    %21 = arith.truncf %19 : vector<2x32xf32> to vector<2x32xbf16>
    %cst_13 = arith.constant dense<0.000000e+00> : vector<2x128xf32>
    %22 = tpu.matmul %21, %0, %cst_13 {dimension_numbers = #tpu.dot_dimension_numbers<[1], [0], [0], [1], [0, 0, 1, 1], [], []>} : vector<2x32xbf16>, vector<32x128xbf16>, vector<2x128xf32> -> vector<2x128xf32>
    %23 = vector.extract_strided_slice %6 {offsets = [0, 0], sizes = [2, 128], strides = [1, 1]} : vector<16x128xf32> to vector<2x128xf32>
    %24 = arith.addf %22, %23 : vector<2x128xf32>
    %25 = arith.mulf %24, %15 : vector<2x128xf32>
    %26 = math.tanh %25 : vector<2x128xf32>
    %27 = arith.mulf %26, %15 : vector<2x128xf32>
    %28 = arith.addf %27, %18 : vector<2x128xf32>
    %29 = vector.extract_strided_slice %28 {offsets = [0, 0], sizes = [2, 32], strides = [1, 1]} : vector<2x128xf32> to vector<2x32xf32>
    %30 = vector.extract_strided_slice %28 {offsets = [0, 32], sizes = [2, 32], strides = [1, 1]} : vector<2x128xf32> to vector<2x32xf32>
    %31 = vector.extract_strided_slice %28 {offsets = [0, 64], sizes = [2, 32], strides = [1, 1]} : vector<2x128xf32> to vector<2x32xf32>
    %32 = vector.extract_strided_slice %28 {offsets = [0, 96], sizes = [2, 32], strides = [1, 1]} : vector<2x128xf32> to vector<2x32xf32>
    %33 = arith.mulf %30, %20 : vector<2x32xf32>
    %34 = arith.mulf %29, %31 : vector<2x32xf32>
    %35 = arith.addf %33, %34 : vector<2x32xf32>
    %36 = math.tanh %35 : vector<2x32xf32>
    %37 = arith.mulf %32, %36 : vector<2x32xf32>
    %c0_14 = arith.constant 0 : index
    %c0_15 = arith.constant 0 : index
    %38 = vector.load %arg8[%c0_14, %c0_15] : memref<16x32xf32, #tpu.memory_space<vmem>>, vector<2x32xf32>
    tpu.vector_store %arg8[%c0_14, %c0_15], %37 {strides = array<i32>} : memref<16x32xf32, #tpu.memory_space<vmem>>, vector<2x32xf32>,
    %39 = arith.truncf %37 : vector<2x32xf32> to vector<2x32xbf16>
    %cst_16 = arith.constant dense<0.000000e+00> : vector<2x128xf32>
    %40 = tpu.matmul %39, %0, %cst_16 {dimension_numbers = #tpu.dot_dimension_numbers<[1], [0], [0], [1], [0, 0, 1, 1], [], []>} : vector<2x32xbf16>, vector<32x128xbf16>, vector<2x128xf32> -> vector<2x128xf32>
    %41 = vector.extract_strided_slice %6 {offsets = [2, 0], sizes = [2, 128], strides = [1, 1]} : vector<16x128xf32> to vector<2x128xf32>
    %42 = arith.addf %40, %41 : vector<2x128xf32>
    %43 = arith.mulf %42, %15 : vector<2x128xf32>
    %44 = math.tanh %43 : vector<2x128xf32>
    %45 = arith.mulf %44, %15 : vector<2x128xf32>
    %46 = arith.addf %45, %18 : vector<2x128xf32>
    %47 = vector.extract_strided_slice %46 {offsets = [0, 0], sizes = [2, 32], strides = [1, 1]} : vector<2x128xf32> to vector<2x32xf32>
    %48 = vector.extract_strided_slice %46 {offsets = [0, 32], sizes = [2, 32], strides = [1, 1]} : vector<2x128xf32> to vector<2x32xf32>
    %49 = vector.extract_strided_slice %46 {offsets = [0, 64], sizes = [2, 32], strides = [1, 1]} : vector<2x128xf32> to vector<2x32xf32>
    %50 = vector.extract_strided_slice %46 {offsets = [0, 96], sizes = [2, 32], strides = [1, 1]} : vector<2x128xf32> to vector<2x32xf32>
    %51 = arith.mulf %48, %35 : vector<2x32xf32>
    %52 = arith.mulf %47, %49 : vector<2x32xf32>
    %53 = arith.addf %51, %52 : vector<2x32xf32>
    %54 = math.tanh %53 : vector<2x32xf32>
    %55 = arith.mulf %50, %54 : vector<2x32xf32>
    %c2 = arith.constant 2 : index
    %c0_17 = arith.constant 0 : index
    %56 = vector.load %arg8[%c2, %c0_17] : memref<16x32xf32, #tpu.memory_space<vmem>>, vector<2x32xf32>
    tpu.vector_store %arg8[%c2, %c0_17], %55 {strides = array<i32>} : memref<16x32xf32, #tpu.memory_space<vmem>>, vector<2x32xf32>,
    %57 = arith.truncf %55 : vector<2x32xf32> to vector<2x32xbf16>
    %cst_18 = arith.constant dense<0.000000e+00> : vector<2x128xf32>
    %58 = tpu.matmul %57, %0, %cst_18 {dimension_numbers = #tpu.dot_dimension_numbers<[1], [0], [0], [1], [0, 0, 1, 1], [], []>} : vector<2x32xbf16>, vector<32x128xbf16>, vector<2x128xf32> -> vector<2x128xf32>
    %59 = vector.extract_strided_slice %6 {offsets = [4, 0], sizes = [2, 128], strides = [1, 1]} : vector<16x128xf32> to vector<2x128xf32>
    %60 = arith.addf %58, %59 : vector<2x128xf32>
    %61 = arith.mulf %60, %15 : vector<2x128xf32>
    %62 = math.tanh %61 : vector<2x128xf32>
    %63 = arith.mulf %62, %15 : vector<2x128xf32>
    %64 = arith.addf %63, %18 : vector<2x128xf32>
    %65 = vector.extract_strided_slice %64 {offsets = [0, 0], sizes = [2, 32], strides = [1, 1]} : vector<2x128xf32> to vector<2x32xf32>
    %66 = vector.extract_strided_slice %64 {offsets = [0, 32], sizes = [2, 32], strides = [1, 1]} : vector<2x128xf32> to vector<2x32xf32>
    %67 = vector.extract_strided_slice %64 {offsets = [0, 64], sizes = [2, 32], strides = [1, 1]} : vector<2x128xf32> to vector<2x32xf32>
    %68 = vector.extract_strided_slice %64 {offsets = [0, 96], sizes = [2, 32], strides = [1, 1]} : vector<2x128xf32> to vector<2x32xf32>
    %69 = arith.mulf %66, %53 : vector<2x32xf32>
    %70 = arith.mulf %65, %67 : vector<2x32xf32>
    %71 = arith.addf %69, %70 : vector<2x32xf32>
    %72 = math.tanh %71 : vector<2x32xf32>
    %73 = arith.mulf %68, %72 : vector<2x32xf32>
    %c4 = arith.constant 4 : index
    %c0_19 = arith.constant 0 : index
    %74 = vector.load %arg8[%c4, %c0_19] : memref<16x32xf32, #tpu.memory_space<vmem>>, vector<2x32xf32>
    tpu.vector_store %arg8[%c4, %c0_19], %73 {strides = array<i32>} : memref<16x32xf32, #tpu.memory_space<vmem>>, vector<2x32xf32>,
    %75 = arith.truncf %73 : vector<2x32xf32> to vector<2x32xbf16>
    %cst_20 = arith.constant dense<0.000000e+00> : vector<2x128xf32>
    %76 = tpu.matmul %75, %0, %cst_20 {dimension_numbers = #tpu.dot_dimension_numbers<[1], [0], [0], [1], [0, 0, 1, 1], [], []>} : vector<2x32xbf16>, vector<32x128xbf16>, vector<2x128xf32> -> vector<2x128xf32>
    %77 = vector.extract_strided_slice %6 {offsets = [6, 0], sizes = [2, 128], strides = [1, 1]} : vector<16x128xf32> to vector<2x128xf32>
    %78 = arith.addf %76, %77 : vector<2x128xf32>
    %79 = arith.mulf %78, %15 : vector<2x128xf32>
    %80 = math.tanh %79 : vector<2x128xf32>
    %81 = arith.mulf %80, %15 : vector<2x128xf32>
    %82 = arith.addf %81, %18 : vector<2x128xf32>
    %83 = vector.extract_strided_slice %82 {offsets = [0, 0], sizes = [2, 32], strides = [1, 1]} : vector<2x128xf32> to vector<2x32xf32>
    %84 = vector.extract_strided_slice %82 {offsets = [0, 32], sizes = [2, 32], strides = [1, 1]} : vector<2x128xf32> to vector<2x32xf32>
    %85 = vector.extract_strided_slice %82 {offsets = [0, 64], sizes = [2, 32], strides = [1, 1]} : vector<2x128xf32> to vector<2x32xf32>
    %86 = vector.extract_strided_slice %82 {offsets = [0, 96], sizes = [2, 32], strides = [1, 1]} : vector<2x128xf32> to vector<2x32xf32>
    %87 = arith.mulf %84, %71 : vector<2x32xf32>
    %88 = arith.mulf %83, %85 : vector<2x32xf32>
    %89 = arith.addf %87, %88 : vector<2x32xf32>
    %90 = math.tanh %89 : vector<2x32xf32>
    %91 = arith.mulf %86, %90 : vector<2x32xf32>
    %c6 = arith.constant 6 : index
    %c0_21 = arith.constant 0 : index
    %92 = vector.load %arg8[%c6, %c0_21] : memref<16x32xf32, #tpu.memory_space<vmem>>, vector<2x32xf32>
    tpu.vector_store %arg8[%c6, %c0_21], %91 {strides = array<i32>} : memref<16x32xf32, #tpu.memory_space<vmem>>, vector<2x32xf32>,
    %93 = arith.truncf %91 : vector<2x32xf32> to vector<2x32xbf16>
    %cst_22 = arith.constant dense<0.000000e+00> : vector<2x128xf32>
    %94 = tpu.matmul %93, %0, %cst_22 {dimension_numbers = #tpu.dot_dimension_numbers<[1], [0], [0], [1], [0, 0, 1, 1], [], []>} : vector<2x32xbf16>, vector<32x128xbf16>, vector<2x128xf32> -> vector<2x128xf32>
    %95 = vector.extract_strided_slice %6 {offsets = [8, 0], sizes = [2, 128], strides = [1, 1]} : vector<16x128xf32> to vector<2x128xf32>
    %96 = arith.addf %94, %95 : vector<2x128xf32>
    %97 = arith.mulf %96, %15 : vector<2x128xf32>
    %98 = math.tanh %97 : vector<2x128xf32>
    %99 = arith.mulf %98, %15 : vector<2x128xf32>
    %100 = arith.addf %99, %18 : vector<2x128xf32>
    %101 = vector.extract_strided_slice %100 {offsets = [0, 0], sizes = [2, 32], strides = [1, 1]} : vector<2x128xf32> to vector<2x32xf32>
    %102 = vector.extract_strided_slice %100 {offsets = [0, 32], sizes = [2, 32], strides = [1, 1]} : vector<2x128xf32> to vector<2x32xf32>
    %103 = vector.extract_strided_slice %100 {offsets = [0, 64], sizes = [2, 32], strides = [1, 1]} : vector<2x128xf32> to vector<2x32xf32>
    %104 = vector.extract_strided_slice %100 {offsets = [0, 96], sizes = [2, 32], strides = [1, 1]} : vector<2x128xf32> to vector<2x32xf32>
    %105 = arith.mulf %102, %89 : vector<2x32xf32>
    %106 = arith.mulf %101, %103 : vector<2x32xf32>
    %107 = arith.addf %105, %106 : vector<2x32xf32>
    %108 = math.tanh %107 : vector<2x32xf32>
    %109 = arith.mulf %104, %108 : vector<2x32xf32>
    %c8 = arith.constant 8 : index
    %c0_23 = arith.constant 0 : index
    %110 = vector.load %arg8[%c8, %c0_23] : memref<16x32xf32, #tpu.memory_space<vmem>>, vector<2x32xf32>
    tpu.vector_store %arg8[%c8, %c0_23], %109 {strides = array<i32>} : memref<16x32xf32, #tpu.memory_space<vmem>>, vector<2x32xf32>,
    %111 = arith.truncf %109 : vector<2x32xf32> to vector<2x32xbf16>
    %cst_24 = arith.constant dense<0.000000e+00> : vector<2x128xf32>
    %112 = tpu.matmul %111, %0, %cst_24 {dimension_numbers = #tpu.dot_dimension_numbers<[1], [0], [0], [1], [0, 0, 1, 1], [], []>} : vector<2x32xbf16>, vector<32x128xbf16>, vector<2x128xf32> -> vector<2x128xf32>
    %113 = vector.extract_strided_slice %6 {offsets = [10, 0], sizes = [2, 128], strides = [1, 1]} : vector<16x128xf32> to vector<2x128xf32>
    %114 = arith.addf %112, %113 : vector<2x128xf32>
    %115 = arith.mulf %114, %15 : vector<2x128xf32>
    %116 = math.tanh %115 : vector<2x128xf32>
    %117 = arith.mulf %116, %15 : vector<2x128xf32>
    %118 = arith.addf %117, %18 : vector<2x128xf32>
    %119 = vector.extract_strided_slice %118 {offsets = [0, 0], sizes = [2, 32], strides = [1, 1]} : vector<2x128xf32> to vector<2x32xf32>
    %120 = vector.extract_strided_slice %118 {offsets = [0, 32], sizes = [2, 32], strides = [1, 1]} : vector<2x128xf32> to vector<2x32xf32>
    %121 = vector.extract_strided_slice %118 {offsets = [0, 64], sizes = [2, 32], strides = [1, 1]} : vector<2x128xf32> to vector<2x32xf32>
    %122 = vector.extract_strided_slice %118 {offsets = [0, 96], sizes = [2, 32], strides = [1, 1]} : vector<2x128xf32> to vector<2x32xf32>
    %123 = arith.mulf %120, %107 : vector<2x32xf32>
    %124 = arith.mulf %119, %121 : vector<2x32xf32>
    %125 = arith.addf %123, %124 : vector<2x32xf32>
    %126 = math.tanh %125 : vector<2x32xf32>
    %127 = arith.mulf %122, %126 : vector<2x32xf32>
    %c10 = arith.constant 10 : index
    %c0_25 = arith.constant 0 : index
    %128 = vector.load %arg8[%c10, %c0_25] : memref<16x32xf32, #tpu.memory_space<vmem>>, vector<2x32xf32>
    tpu.vector_store %arg8[%c10, %c0_25], %127 {strides = array<i32>} : memref<16x32xf32, #tpu.memory_space<vmem>>, vector<2x32xf32>,
    %129 = arith.truncf %127 : vector<2x32xf32> to vector<2x32xbf16>
    %cst_26 = arith.constant dense<0.000000e+00> : vector<2x128xf32>
    %130 = tpu.matmul %129, %0, %cst_26 {dimension_numbers = #tpu.dot_dimension_numbers<[1], [0], [0], [1], [0, 0, 1, 1], [], []>} : vector<2x32xbf16>, vector<32x128xbf16>, vector<2x128xf32> -> vector<2x128xf32>
    %131 = vector.extract_strided_slice %6 {offsets = [12, 0], sizes = [2, 128], strides = [1, 1]} : vector<16x128xf32> to vector<2x128xf32>
    %132 = arith.addf %130, %131 : vector<2x128xf32>
    %133 = arith.mulf %132, %15 : vector<2x128xf32>
    %134 = math.tanh %133 : vector<2x128xf32>
    %135 = arith.mulf %134, %15 : vector<2x128xf32>
    %136 = arith.addf %135, %18 : vector<2x128xf32>
    %137 = vector.extract_strided_slice %136 {offsets = [0, 0], sizes = [2, 32], strides = [1, 1]} : vector<2x128xf32> to vector<2x32xf32>
    %138 = vector.extract_strided_slice %136 {offsets = [0, 32], sizes = [2, 32], strides = [1, 1]} : vector<2x128xf32> to vector<2x32xf32>
    %139 = vector.extract_strided_slice %136 {offsets = [0, 64], sizes = [2, 32], strides = [1, 1]} : vector<2x128xf32> to vector<2x32xf32>
    %140 = vector.extract_strided_slice %136 {offsets = [0, 96], sizes = [2, 32], strides = [1, 1]} : vector<2x128xf32> to vector<2x32xf32>
    %141 = arith.mulf %138, %125 : vector<2x32xf32>
    %142 = arith.mulf %137, %139 : vector<2x32xf32>
    %143 = arith.addf %141, %142 : vector<2x32xf32>
    %144 = math.tanh %143 : vector<2x32xf32>
    %145 = arith.mulf %140, %144 : vector<2x32xf32>
    %c12 = arith.constant 12 : index
    %c0_27 = arith.constant 0 : index
    %146 = vector.load %arg8[%c12, %c0_27] : memref<16x32xf32, #tpu.memory_space<vmem>>, vector<2x32xf32>
    tpu.vector_store %arg8[%c12, %c0_27], %145 {strides = array<i32>} : memref<16x32xf32, #tpu.memory_space<vmem>>, vector<2x32xf32>,
    %147 = arith.truncf %145 : vector<2x32xf32> to vector<2x32xbf16>
    %cst_28 = arith.constant dense<0.000000e+00> : vector<2x128xf32>
    %148 = tpu.matmul %147, %0, %cst_28 {dimension_numbers = #tpu.dot_dimension_numbers<[1], [0], [0], [1], [0, 0, 1, 1], [], []>} : vector<2x32xbf16>, vector<32x128xbf16>, vector<2x128xf32> -> vector<2x128xf32>
    %149 = vector.extract_strided_slice %6 {offsets = [14, 0], sizes = [2, 128], strides = [1, 1]} : vector<16x128xf32> to vector<2x128xf32>
    %150 = arith.addf %148, %149 : vector<2x128xf32>
    %151 = arith.mulf %150, %15 : vector<2x128xf32>
    %152 = math.tanh %151 : vector<2x128xf32>
    %153 = arith.mulf %152, %15 : vector<2x128xf32>
    %154 = arith.addf %153, %18 : vector<2x128xf32>
    %155 = vector.extract_strided_slice %154 {offsets = [0, 0], sizes = [2, 32], strides = [1, 1]} : vector<2x128xf32> to vector<2x32xf32>
    %156 = vector.extract_strided_slice %154 {offsets = [0, 32], sizes = [2, 32], strides = [1, 1]} : vector<2x128xf32> to vector<2x32xf32>
    %157 = vector.extract_strided_slice %154 {offsets = [0, 64], sizes = [2, 32], strides = [1, 1]} : vector<2x128xf32> to vector<2x32xf32>
    %158 = vector.extract_strided_slice %154 {offsets = [0, 96], sizes = [2, 32], strides = [1, 1]} : vector<2x128xf32> to vector<2x32xf32>
    %159 = arith.mulf %156, %143 : vector<2x32xf32>
    %160 = arith.mulf %155, %157 : vector<2x32xf32>
    %161 = arith.addf %159, %160 : vector<2x32xf32>
    %162 = math.tanh %161 : vector<2x32xf32>
    %163 = arith.mulf %158, %162 : vector<2x32xf32>
    %c14 = arith.constant 14 : index
    %c0_29 = arith.constant 0 : index
    %164 = vector.load %arg8[%c14, %c0_29] : memref<16x32xf32, #tpu.memory_space<vmem>>, vector<2x32xf32>
    tpu.vector_store %arg8[%c14, %c0_29], %163 {strides = array<i32>} : memref<16x32xf32, #tpu.memory_space<vmem>>, vector<2x32xf32>,
    %c0_30 = arith.constant 0 : index
    %c0_31 = arith.constant 0 : index
    %165 = vector.load %arg8[%c0_30, %c0_31] : memref<16x32xf32, #tpu.memory_space<vmem>>, vector<16x32xf32>
    %166 = arith.truncf %165 : vector<16x32xf32> to vector<16x32xbf16>
    %c0_32 = arith.constant 0 : index
    %c0_33 = arith.constant 0 : index
    %167 = vector.load %arg5[%c0_32, %c0_33] : memref<32x128xbf16, #tpu.memory_space<vmem>>, vector<32x128xbf16>
    %cst_34 = arith.constant dense<0.000000e+00> : vector<16x128xf32>
    %168 = tpu.matmul %166, %167, %cst_34 {dimension_numbers = #tpu.dot_dimension_numbers<[1], [0], [0], [1], [0, 0, 1, 1], [], []>} : vector<16x32xbf16>, vector<32x128xbf16>, vector<16x128xf32> -> vector<16x128xf32>
    %c0_35 = arith.constant 0 : index
    %c0_36 = arith.constant 0 : index
    %169 = vector.load %arg6[%c0_35, %c0_36] : memref<1x128xf32, #tpu.memory_space<vmem>>, vector<1x128xf32>
    %170 = vector.broadcast %169 : vector<1x128xf32> to vector<16x128xf32>
    %171 = arith.addf %168, %170 : vector<16x128xf32>
    %cst_37 = arith.constant 0.000000e+00 : f32
    %172 = vector.broadcast %cst_37 : f32 to vector<16x128xf32>
    %173 = arith.maximumf %171, %172 : vector<16x128xf32>
    %174 = tpu.iota {dimensions = array<i32: 1>} : vector<16x128xi32>
    %c8_i32 = arith.constant 8 : i32
    %175 = vector.broadcast %c8_i32 : i32 to vector<16x128xi32>
    %176 = arith.cmpi slt, %174, %175 : vector<16x128xi32>
    %cst_38 = arith.constant -1.000000e+30 : f32
    %177 = vector.broadcast %cst_38 : f32 to vector<16x128xf32>
    %178 = arith.select %176, %173, %177 : vector<16x128xi1>, vector<16x128xf32>
    %cst_39 = arith.constant dense<0xFF800000> : vector<16xf32>
    %179 = vector.multi_reduction <maximumf>, %178, %cst_39 [1] : vector<16x128xf32> to vector<16xf32>
    %180 = vector.shape_cast %179 : vector<16xf32> to vector<16x1xf32>
    %181 = vector.broadcast %180 : vector<16x1xf32> to vector<16x128xf32>
    %182 = arith.subf %178, %181 : vector<16x128xf32>
    %183 = math.exp %182 : vector<16x128xf32>
    %cst_40 = arith.constant dense<0.000000e+00> : vector<16xf32>
    %184 = vector.multi_reduction <add>, %183, %cst_40 [1] : vector<16x128xf32> to vector<16xf32>
    %185 = vector.shape_cast %184 : vector<16xf32> to vector<16x1xf32>
    %186 = math.log %185 : vector<16x1xf32>
    %187 = arith.addf %180, %186 : vector<16x1xf32>
    %188 = vector.broadcast %187 : vector<16x1xf32> to vector<16x128xf32>
    %189 = arith.subf %178, %188 : vector<16x128xf32>
    %c0_41 = arith.constant 0 : index
    %c0_42 = arith.constant 0 : index
    %190 = vector.load %arg7[%c0_41, %c0_42] : memref<16x128xf32, #tpu.memory_space<vmem>>, vector<16x128xf32>
    tpu.vector_store %arg7[%c0_41, %c0_42], %189 {strides = array<i32>} : memref<16x128xf32, #tpu.memory_space<vmem>>, vector<16x128xf32>,
    return
  }
  func.func @transform_0(%arg0: i32) -> (i32, i32) {
    %c0_i32 = arith.constant 0 : i32
    %c0_i32_0 = arith.constant 0 : i32
    %c0_i32_1 = arith.constant 0 : i32
    return %c0_i32, %c0_i32_0 : i32, i32
  }
  func.func @transform_1(%arg0: i32) -> (i32, i32) {
    %c0_i32 = arith.constant 0 : i32
    %c0_i32_0 = arith.constant 0 : i32
    %c0_i32_1 = arith.constant 0 : i32
    return %c0_i32, %c0_i32_0 : i32, i32
  }
  func.func @transform_2(%arg0: i32) -> (i32, i32) {
    %c0_i32 = arith.constant 0 : i32
    %c0_i32_0 = arith.constant 0 : i32
    %c0_i32_1 = arith.constant 0 : i32
    return %c0_i32, %c0_i32_0 : i32, i32
  }
  func.func @transform_3(%arg0: i32) -> (i32, i32) {
    %c0_i32 = arith.constant 0 : i32
    %c0_i32_0 = arith.constant 0 : i32
    %c0_i32_1 = arith.constant 0 : i32
    return %c0_i32, %c0_i32_0 : i32, i32
  }
  func.func @transform_4(%arg0: i32) -> (i32, i32) {
    %c0_i32 = arith.constant 0 : i32
    %c0_i32_0 = arith.constant 0 : i32
    %c0_i32_1 = arith.constant 0 : i32
    return %c0_i32, %c0_i32_0 : i32, i32
  }
  func.func @transform_5(%arg0: i32) -> (i32, i32) {
    %c0_i32 = arith.constant 0 : i32
    %c0_i32_0 = arith.constant 0 : i32
    %c0_i32_1 = arith.constant 0 : i32
    return %c0_i32, %c0_i32_0 : i32, i32
  }
  func.func @transform_6(%arg0: i32) -> (i32, i32) {
    %c0_i32 = arith.constant 0 : i32
    %c0_i32_0 = arith.constant 0 : i32
    %c0_i32_1 = arith.constant 0 : i32
    return %c0_i32, %c0_i32_0 : i32, i32
  }
}

</mosaic_0001>

<llo_original>
// kernel: tpu_custom_call.1
$region0: #{tpu_custom_call.1}
  #allocation0 [shape = 'u32[]', space=smem, size = 0x4, offset = 0x4, fixed_abs, tag = 'smem constant byte address 0x4 - core index']
  #allocation1 [shape = 'u32[144,128]{1,0:T(1,128)}', space=vmem, size = 0x12000, scoped, tag = 'internal scratch']
  #allocation2 [shape = 'f32[16,32]{1,0:T(8,128)}', space=vmem, size = 0x2000, scoped, tag = 'scratch operand']
  %s0 = inlined_call_operand.hbm [shape: bf16[16,64], index: 0, kind: input, shape index: {}]
  %s1 = inlined_call_operand.hbm [shape: bf16[64,128], index: 1, kind: input, shape index: {}]
  %s2 = inlined_call_operand.hbm [shape: bf16[32,128], index: 2, kind: input, shape index: {}]
  %s3 = inlined_call_operand.vmem [shape: f32[1,128], index: 3, kind: input, shape index: {}]
  %s4 = inlined_call_operand.hbm [shape: bf16[32,128], index: 4, kind: input, shape index: {}]
  %s5 = inlined_call_operand.vmem [shape: f32[1,128], index: 5, kind: input, shape index: {}]
  %s6 = inlined_call_operand.hbm [shape: f32[16,128], index: 6, kind: output, shape index: {}]
  %s7 = sld [smem:[#allocation0]]
  $region50: #{tpu_custom_call.1} parent=0
    _
  %s9 = ssub.s32 1, %s7
  %s10 = scalar_select 0, %s9, %s7
  $region1: #{tpu_custom_call.1} parent=0
    #allocation3 [shape = 'u8[4096]{0}', space=vmem, size = 0x1000, scoped, tag = 'input window, operand 0, single buffered']
    #allocation4 [shape = 's32[1]{0}', space=sflag, size = 0x4, scoped, tag = 'scoped memory for tpu_custom_call.1']
    #allocation5 [shape = 's32[1]{0}', space=sflag, size = 0x4, scoped, tag = 'scoped memory for tpu_custom_call.1']
    #allocation6 [shape = 'u8[16384]{0}', space=vmem, size = 0x4000, scoped, tag = 'input window, operand 1, single buffered']
    #allocation7 [shape = 's32[1]{0}', space=sflag, size = 0x4, scoped, tag = 'scoped memory for tpu_custom_call.1']
    #allocation8 [shape = 'u8[8192]{0}', space=vmem, size = 0x2000, scoped, tag = 'input window, operand 2, single buffered']
    #allocation9 [shape = 'u8[8192]{0}', space=vmem, size = 0x2000, scoped, tag = 'input window, operand 4, single buffered']
    #allocation10 [shape = 's32[1]{0}', space=sflag, size = 0x4, scoped, tag = 'scoped memory for tpu_custom_call.1']
    #allocation11 [shape = 'u8[8192]{0}', space=vmem, size = 0x2000, scoped, tag = 'output window, operand 0, single buffered']
    %11 = vsyncpa [#allocation4], 0
    %12 = vsyncpa [#allocation7], 0
    %13 = vsyncpa [#allocation10], 0
    %14 = vsyncpa [#allocation5], 0
    // Predicated region
    $region2: #{tpu_custom_call.1} parent=1 // pred_check
      _
    $region3: #{tpu_custom_call.1} parent=1 // pred_check_branch
      %16 = sbr.rel (0) target = $region5
    $region4: #{tpu_custom_call.1} parent=1 // pred_region
      %s18 = ssub.s32 128, 128
      %19 = vsyncadd [#allocation4], %s18
      %s20 = sshll.u32 [#allocation3], 4
      %s21 = int_to_ptr.vmem [resolvable:$true] %s20
      %26 = dma.hbm_to_vmem [thread:$0]  %s0, 128, %s21, [#allocation4], 64, 64, 4
    $region5: #{tpu_custom_call.1} parent=1 // pred_fallthru
      _
    // Predicated region
    $region6: #{tpu_custom_call.1} parent=1 // pred_check
      _
    $region7: #{tpu_custom_call.1} parent=1 // pred_check_branch
      %28 = sbr.rel (0) target = $region9
    $region8: #{tpu_custom_call.1} parent=1 // pred_region
      %s30 = ssub.s32 512, 512
      %31 = vsyncadd [#allocation7], %s30
      %s32 = sshll.u32 [#allocation6], 4
      %s33 = int_to_ptr.vmem [resolvable:$true] %s32
      %38 = dma.hbm_to_vmem [thread:$0]  %s1, 512, %s33, [#allocation7], 64, 64, 4
    $region9: #{tpu_custom_call.1} parent=1 // pred_fallthru
      _
    // Predicated region
    $region10: #{tpu_custom_call.1} parent=1 // pred_check
      _
    $region11: #{tpu_custom_call.1} parent=1 // pred_check_branch
      %40 = sbr.rel (0) target = $region13
    $region12: #{tpu_custom_call.1} parent=1 // pred_region
      %s42 = ssub.s32 256, 256
      %43 = vsyncadd [#allocation7], %s42
      %s44 = sshll.u32 [#allocation8], 4
      %s45 = int_to_ptr.vmem [resolvable:$true] %s44
      %50 = dma.hbm_to_vmem [thread:$0]  %s2, 256, %s45, [#allocation7], 64, 64, 4
    $region13: #{tpu_custom_call.1} parent=1 // pred_fallthru
      _
    // Predicated region
    $region14: #{tpu_custom_call.1} parent=1 // pred_check
      _
    $region15: #{tpu_custom_call.1} parent=1 // pred_check_branch
      %52 = sbr.rel (0) target = $region17
    $region16: #{tpu_custom_call.1} parent=1 // pred_region
      _
    $region17: #{tpu_custom_call.1} parent=1 // pred_fallthru
      _
    // Predicated region
    $region18: #{tpu_custom_call.1} parent=1 // pred_check
      _
    $region19: #{tpu_custom_call.1} parent=1 // pred_check_branch
      %54 = sbr.rel (0) target = $region21
    $region20: #{tpu_custom_call.1} parent=1 // pred_region
      %s56 = ssub.s32 256, 256
      %57 = vsyncadd [#allocation10], %s56
      %s58 = sshll.u32 [#allocation9], 4
      %s59 = int_to_ptr.vmem [resolvable:$true] %s58
      %64 = dma.hbm_to_vmem [thread:$0]  %s4, 256, %s59, [#allocation10], 64, 64, 4
    $region21: #{tpu_custom_call.1} parent=1 // pred_fallthru
      _
    // Predicated region
    $region22: #{tpu_custom_call.1} parent=1 // pred_check
      _
    $region23: #{tpu_custom_call.1} parent=1 // pred_check_branch
      %66 = sbr.rel (0) target = $region25
    $region24: #{tpu_custom_call.1} parent=1 // pred_region
      _
    $region25: #{tpu_custom_call.1} parent=1 // pred_fallthru
      _
    // Predicated region
    $region26: #{tpu_custom_call.1} parent=1 // pred_check
      _
    $region27: #{tpu_custom_call.1} parent=1 // pred_check_branch
      %68 = sbr.rel (0) target = $region29
    $region28: #{tpu_custom_call.1} parent=1 // pred_region
      %69 = dma.done [#allocation4], 128
    $region29: #{tpu_custom_call.1} parent=1 // pred_fallthru
      _
    // Predicated region
    $region30: #{tpu_custom_call.1} parent=1 // pred_check
      _
    $region31: #{tpu_custom_call.1} parent=1 // pred_check_branch
      %71 = sbr.rel (0) target = $region33
    $region32: #{tpu_custom_call.1} parent=1 // pred_region
      %72 = dma.done [#allocation7], 512
    $region33: #{tpu_custom_call.1} parent=1 // pred_fallthru
      _
    // Predicated region
    $region34: #{tpu_custom_call.1} parent=1 // pred_check
      _
    $region35: #{tpu_custom_call.1} parent=1 // pred_check_branch
      %74 = sbr.rel (0) target = $region37
    $region36: #{tpu_custom_call.1} parent=1 // pred_region
      %75 = dma.done [#allocation7], 256
    $region37: #{tpu_custom_call.1} parent=1 // pred_fallthru
      _
    // Predicated region
    $region38: #{tpu_custom_call.1} parent=1 // pred_check
      _
    $region39: #{tpu_custom_call.1} parent=1 // pred_check_branch
      %77 = sbr.rel (0) target = $region41
    $region40: #{tpu_custom_call.1} parent=1 // pred_region
      %78 = dma.done [#allocation10], 256
    $region41: #{tpu_custom_call.1} parent=1 // pred_fallthru
      _
    %v80 = vld [vmem:[#allocation8] sm:$0xf]
    %v81 = vld [vmem:[#allocation8 + $0x4] sm:$0xf]
    %v82 = vld [vmem:[#allocation8 + $0x8] sm:$0xf]
    %v83 = vld [vmem:[#allocation8 + $0xc] sm:$0xf]
    %v84 = vld [vmem:[#allocation3] sm:$0xf]
    %v85 = vld [vmem:[#allocation3 + $0x4] sm:$0xf]
    %v86 = vld [vmem:[#allocation6] sm:$0xf]
    %v87 = vld [vmem:[#allocation6 + $0x4] sm:$0xf]
    %v88 = vld [vmem:[#allocation6 + $0x8] sm:$0xf]
    %v89 = vld [vmem:[#allocation6 + $0xc] sm:$0xf]
    %v90 = vld [vmem:[#allocation6 + $0x10] sm:$0xf]
    %v91 = vld [vmem:[#allocation6 + $0x14] sm:$0xf]
    %v92 = vld [vmem:[#allocation6 + $0x18] sm:$0xf]
    %v93 = vld [vmem:[#allocation6 + $0x1c] sm:$0xf]
    %v94 = vld [vmem:[%s3] sm:$0x1]
    %v96 = vlaneseq
    %v97 = vshrl.u32 %v96, 7
    %v98 = vsub.s32 0, %v97
    %v99 = vrot.slane %v94, %v98
    %v103 = vunpack.c.l.b16 %v84
    %v104 = vunpack.c.l.b16 %v85
    %v105 = vpack.c.b16 %v104, %v103
    %v114 = vunpack.c.l.b16 %v86
    %v115 = vunpack.c.l.b16 %v87
    %v116 = vunpack.c.l.b16 %v88
    %v117 = vunpack.c.l.b16 %v89
    %v118 = vunpack.c.l.b16 %v90
    %v119 = vunpack.c.l.b16 %v91
    %v120 = vunpack.c.l.b16 %v92
    %v121 = vunpack.c.l.b16 %v93
    %v122 = vpack.c.b16 %v115, %v114
    %v123 = vpack.c.b16 %v117, %v116
    %v124 = vpack.c.b16 %v119, %v118
    %v125 = vpack.c.b16 %v121, %v120
    %vm130 = vcmask 523264
    %v132 = vsel %vm130, %v105, 0
    %134 = vmatprep.subr.bf16.mxu0 0
    %135 = vmatpush1.bf16.msra.mxu0 0
    %136 = vmatprep.subr.bf16.mxu0 0
    %137 = vmatpush1.bf16.msra.mxu0 0
    %138 = vmatprep.subr.bf16.mxu0 0
    %139 = vmatpush1.bf16.msra.mxu0 0
    %140 = vmatprep.subr.bf16.mxu0 0
    %141 = vmatpush1.bf16.msra.mxu0 0
    %142 = vmatprep.subr.bf16.mxu0 0
    %143 = vmatpush1.bf16.msra.mxu0 %v125
    %144 = vmatprep.subr.bf16.mxu0 0
    %145 = vmatpush1.bf16.msra.mxu0 %v124
    %146 = vmatprep.subr.bf16.mxu0 0
    %147 = vmatpush1.bf16.msra.mxu0 %v123
    %148 = vmatprep.subr.bf16.mxu0 0
    %149 = vmatpush1.bf16.msra.mxu0 %v122
    %150 = vmatprep.subr.bf16.mxu0 0
    %151 = vmatpush2.bf16.msra.mxu0 0
    %152 = vmatprep.subr.bf16.mxu0 0
    %153 = vmatpush2.bf16.msra.mxu0 0
    %154 = vmatprep.subr.bf16.mxu0 0
    %155 = vmatpush2.bf16.msra.mxu0 0
    %156 = vmatprep.subr.bf16.mxu0 0
    %157 = vmatpush2.bf16.msra.mxu0 0
    %158 = vmatprep.subr.bf16.mxu0 0
    %159 = vmatpush2.bf16.msra.mxu0 0
    %160 = vmatprep.subr.bf16.mxu0 0
    %161 = vmatpush2.bf16.msra.mxu0 0
    %162 = vmatprep.subr.bf16.mxu0 0
    %163 = vmatpush2.bf16.msra.mxu0 0
    %164 = vmatprep.subr.bf16.mxu0 0
    %165 = vmatpush2.bf16.msra.mxu0 0
    %166 = vmatprep.mubr.bf16.mxu0 0
    %167 = vmatmul.mubr.bf16.gmra.mxu0 %v132
    %v168 = vpop.f32.mrf.mxu0
    %v169 = vadd.f32 %v99, %v168
    %v170 = vpop.f32.mrf.mxu0
    %v171 = vpop.f32.mrf.mxu0
    %v172 = vadd.f32 %v99, %v171
    %v173 = vpop.f32.mrf.mxu0
    %174 = vdwg.mxu0
    %v175 = vlaneseq
    %v176 = vand.u32 %v175, 127
    %vm177 = vcmp.ge.s32.totalorder %v176, 64
    %vm178 = vcmp.lt.s32.totalorder %v176, 96
    %vm179 = vmand %vm177, %vm178
    %v180 = vsel %vm179, 1.0, 0.5
    %v181 = vsel %vm179, 0.0, 0.5
    %v186 = vunpack.c.l.b16 %v80
    %v187 = vunpack.c.l.b16 %v81
    %v188 = vunpack.c.l.b16 %v82
    %v189 = vunpack.c.l.b16 %v83
    %v190 = vpack.c.b16 %v187, %v186
    %v191 = vpack.c.b16 %v189, %v188
    %vm194 = vcmask 261120
    %v196 = vsel %vm194, 0, 0
    %198 = vmatprep.subr.bf16.mxu0 0
    %199 = vmatpush1.bf16.msra.mxu0 0
    %200 = vmatprep.subr.bf16.mxu0 0
    %201 = vmatpush1.bf16.msra.mxu0 0
    %202 = vmatprep.subr.bf16.mxu0 0
    %203 = vmatpush1.bf16.msra.mxu0 0
    %204 = vmatprep.subr.bf16.mxu0 0
    %205 = vmatpush1.bf16.msra.mxu0 0
    %206 = vmatprep.subr.bf16.mxu0 0
    %207 = vmatpush1.bf16.msra.mxu0 0
    %208 = vmatprep.subr.bf16.mxu0 0
    %209 = vmatpush1.bf16.msra.mxu0 0
    %210 = vmatprep.subr.bf16.mxu0 0
    %211 = vmatpush1.bf16.msra.mxu0 %v191
    %212 = vmatprep.subr.bf16.mxu0 0
    %213 = vmatpush1.bf16.msra.mxu0 %v190
    %214 = vmatprep.subr.bf16.mxu0 0
    %215 = vmatpush2.bf16.msra.mxu0 0
    %216 = vmatprep.subr.bf16.mxu0 0
    %217 = vmatpush2.bf16.msra.mxu0 0
    %218 = vmatprep.subr.bf16.mxu0 0
    %219 = vmatpush2.bf16.msra.mxu0 0
    %220 = vmatprep.subr.bf16.mxu0 0
    %221 = vmatpush2.bf16.msra.mxu0 0
    %222 = vmatprep.subr.bf16.mxu0 0
    %223 = vmatpush2.bf16.msra.mxu0 0
    %224 = vmatprep.subr.bf16.mxu0 0
    %225 = vmatpush2.bf16.msra.mxu0 0
    %226 = vmatprep.subr.bf16.mxu0 0
    %227 = vmatpush2.bf16.msra.mxu0 0
    %228 = vmatprep.subr.bf16.mxu0 0
    %229 = vmatpush2.bf16.msra.mxu0 0
    %230 = vmatprep.mubr.bf16.mxu0 0
    %231 = vmatmul.mubr.bf16.gmra.mxu0 %v196
    %v232 = vpop.f32.mrf.mxu0
    %v233 = vadd.f32 %v169, %v232
    %v234 = vpop.f32.mrf.mxu0
    %v235 = vpop.f32.mrf.mxu0
    %v236 = vpop.f32.mrf.mxu0
    %237 = vdwg.mxu0
    %v238 = vmul.f32 %v233, %v180
    %v239 = vtanh.pop %v238
    %v240 = vmul.f32 %v239, %v180
    %v241 = vadd.f32 %v240, %v181
    %v242 = vmul.f32 %v241, 0.0
    %244 = vrot.lane.b32.xlu0 %v241, 64
    %v245 = vpop.permute.xlu0 %244
    %v247 = vmul.f32 %v241, %v245
    %249 = vrot.lane.b32.xlu0 %v247, 32
    %v250 = vpop.permute.xlu0 %249
    %v252 = vadd.f32 %v242, %v250
    %v253 = vtanh.pop %v252
    %255 = vrot.lane.b32.xlu0 %v253, 64
    %v256 = vpop.permute.xlu0 %255
    %v258 = vmul.f32 %v241, %v256
    %260 = vrot.lane.b32.xlu0 %v258, 32
    %v261 = vpop.permute.xlu0 %260
    %vm263 = vcmask 254976
    %264 = vst.msk [vmem:[#allocation2] sm:$0x3] %vm263, %v261
    %v265 = vpack.c.bf16 %v258, %v258
    %267 = vrot.lane.b32.xlu0 %v265, 32
    %v268 = vpop.permute.xlu0 %267
    %v270 = vrot.slane %v169, 2
    %v273 = vsel %vm194, %v268, 0
    %275 = vmatprep.subr.bf16.mxu0 0
    %276 = vmatpush1.bf16.msra.mxu0 0
    %277 = vmatprep.subr.bf16.mxu0 0
    %278 = vmatpush1.bf16.msra.mxu0 0
    %279 = vmatprep.subr.bf16.mxu0 0
    %280 = vmatpush1.bf16.msra.mxu0 0
    %281 = vmatprep.subr.bf16.mxu0 0
    %282 = vmatpush1.bf16.msra.mxu0 0
    %283 = vmatprep.subr.bf16.mxu0 0
    %284 = vmatpush1.bf16.msra.mxu0 0
    %285 = vmatprep.subr.bf16.mxu0 0
    %286 = vmatpush1.bf16.msra.mxu0 0
    %287 = vmatprep.subr.bf16.mxu0 0
    %288 = vmatpush1.bf16.msra.mxu0 %v191
    %289 = vmatprep.subr.bf16.mxu0 0
    %290 = vmatpush1.bf16.msra.mxu0 %v190
    %291 = vmatprep.subr.bf16.mxu0 0
    %292 = vmatpush2.bf16.msra.mxu0 0
    %293 = vmatprep.subr.bf16.mxu0 0
    %294 = vmatpush2.bf16.msra.mxu0 0
    %295 = vmatprep.subr.bf16.mxu0 0
    %296 = vmatpush2.bf16.msra.mxu0 0
    %297 = vmatprep.subr.bf16.mxu0 0
    %298 = vmatpush2.bf16.msra.mxu0 0
    %299 = vmatprep.subr.bf16.mxu0 0
    %300 = vmatpush2.bf16.msra.mxu0 0
    %301 = vmatprep.subr.bf16.mxu0 0
    %302 = vmatpush2.bf16.msra.mxu0 0
    %303 = vmatprep.subr.bf16.mxu0 0
    %304 = vmatpush2.bf16.msra.mxu0 0
    %305 = vmatprep.subr.bf16.mxu0 0
    %306 = vmatpush2.bf16.msra.mxu0 0
    %307 = vmatprep.mubr.bf16.mxu0 0
    %308 = vmatmul.mubr.bf16.gmra.mxu0 %v273
    %v309 = vpop.f32.mrf.mxu0
    %v310 = vadd.f32 %v270, %v309
    %v311 = vpop.f32.mrf.mxu0
    %v312 = vpop.f32.mrf.mxu0
    %v313 = vpop.f32.mrf.mxu0
    %314 = vdwg.mxu0
    %v315 = vmul.f32 %v310, %v180
    %v316 = vtanh.pop %v315
    %v317 = vmul.f32 %v316, %v180
    %v318 = vadd.f32 %v317, %v181
    %v319 = vmul.f32 %v318, %v252
    %321 = vrot.lane.b32.xlu0 %v318, 64
    %v322 = vpop.permute.xlu0 %321
    %v324 = vmul.f32 %v318, %v322
    %326 = vrot.lane.b32.xlu0 %v324, 32
    %v327 = vpop.permute.xlu0 %326
    %v329 = vadd.f32 %v319, %v327
    %v330 = vtanh.pop %v329
    %332 = vrot.lane.b32.xlu0 %v330, 64
    %v333 = vpop.permute.xlu0 %332
    %v335 = vmul.f32 %v318, %v333
    %337 = vrot.lane.b32.xlu0 %v335, 32
    %v338 = vpop.permute.xlu0 %337
    %340 = vst.msk [vmem:[#allocation2 + $0x2] sm:$0x3] %vm263, %v338
    %v341 = vpack.c.bf16 %v335, %v335
    %343 = vrot.lane.b32.xlu0 %v341, 32
    %v344 = vpop.permute.xlu0 %343
    %v345 = vrot.slane %v169, 4
    %v348 = vsel %vm194, %v344, 0
    %350 = vmatprep.subr.bf16.mxu0 0
    %351 = vmatpush1.bf16.msra.mxu0 0
    %352 = vmatprep.subr.bf16.mxu0 0
    %353 = vmatpush1.bf16.msra.mxu0 0
    %354 = vmatprep.subr.bf16.mxu0 0
    %355 = vmatpush1.bf16.msra.mxu0 0
    %356 = vmatprep.subr.bf16.mxu0 0
    %357 = vmatpush1.bf16.msra.mxu0 0
    %358 = vmatprep.subr.bf16.mxu0 0
    %359 = vmatpush1.bf16.msra.mxu0 0
    %360 = vmatprep.subr.bf16.mxu0 0
    %361 = vmatpush1.bf16.msra.mxu0 0
    %362 = vmatprep.subr.bf16.mxu0 0
    %363 = vmatpush1.bf16.msra.mxu0 %v191
    %364 = vmatprep.subr.bf16.mxu0 0
    %365 = vmatpush1.bf16.msra.mxu0 %v190
    %366 = vmatprep.subr.bf16.mxu0 0
    %367 = vmatpush2.bf16.msra.mxu0 0
    %368 = vmatprep.subr.bf16.mxu0 0
    %369 = vmatpush2.bf16.msra.mxu0 0
    %370 = vmatprep.subr.bf16.mxu0 0
    %371 = vmatpush2.bf16.msra.mxu0 0
    %372 = vmatprep.subr.bf16.mxu0 0
    %373 = vmatpush2.bf16.msra.mxu0 0
    %374 = vmatprep.subr.bf16.mxu0 0
    %375 = vmatpush2.bf16.msra.mxu0 0
    %376 = vmatprep.subr.bf16.mxu0 0
    %377 = vmatpush2.bf16.msra.mxu0 0
    %378 = vmatprep.subr.bf16.mxu0 0
    %379 = vmatpush2.bf16.msra.mxu0 0
    %380 = vmatprep.subr.bf16.mxu0 0
    %381 = vmatpush2.bf16.msra.mxu0 0
    %382 = vmatprep.mubr.bf16.mxu0 0
    %383 = vmatmul.mubr.bf16.gmra.mxu0 %v348
    %v384 = vpop.f32.mrf.mxu0
    %v385 = vadd.f32 %v345, %v384
    %v386 = vpop.f32.mrf.mxu0
    %v387 = vpop.f32.mrf.mxu0
    %v388 = vpop.f32.mrf.mxu0
    %389 = vdwg.mxu0
    %v390 = vmul.f32 %v385, %v180
    %v391 = vtanh.pop %v390
    %v392 = vmul.f32 %v391, %v180
    %v393 = vadd.f32 %v392, %v181
    %v394 = vmul.f32 %v393, %v329
    %396 = vrot.lane.b32.xlu0 %v393, 64
    %v397 = vpop.permute.xlu0 %396
    %v399 = vmul.f32 %v393, %v397
    %401 = vrot.lane.b32.xlu0 %v399, 32
    %v402 = vpop.permute.xlu0 %401
    %v404 = vadd.f32 %v394, %v402
    %v405 = vtanh.pop %v404
    %407 = vrot.lane.b32.xlu0 %v405, 64
    %v408 = vpop.permute.xlu0 %407
    %v410 = vmul.f32 %v393, %v408
    %412 = vrot.lane.b32.xlu0 %v410, 32
    %v413 = vpop.permute.xlu0 %412
    %415 = vst.msk [vmem:[#allocation2 + $0x4] sm:$0x3] %vm263, %v413
    %v416 = vpack.c.bf16 %v410, %v410
    %418 = vrot.lane.b32.xlu0 %v416, 32
    %v419 = vpop.permute.xlu0 %418
    %v420 = vrot.slane %v169, 6
    %v423 = vsel %vm194, %v419, 0
    %425 = vmatprep.subr.bf16.mxu0 0
    %426 = vmatpush1.bf16.msra.mxu0 0
    %427 = vmatprep.subr.bf16.mxu0 0
    %428 = vmatpush1.bf16.msra.mxu0 0
    %429 = vmatprep.subr.bf16.mxu0 0
    %430 = vmatpush1.bf16.msra.mxu0 0
    %431 = vmatprep.subr.bf16.mxu0 0
    %432 = vmatpush1.bf16.msra.mxu0 0
    %433 = vmatprep.subr.bf16.mxu0 0
    %434 = vmatpush1.bf16.msra.mxu0 0
    %435 = vmatprep.subr.bf16.mxu0 0
    %436 = vmatpush1.bf16.msra.mxu0 0
    %437 = vmatprep.subr.bf16.mxu0 0
    %438 = vmatpush1.bf16.msra.mxu0 %v191
    %439 = vmatprep.subr.bf16.mxu0 0
    %440 = vmatpush1.bf16.msra.mxu0 %v190
    %441 = vmatprep.subr.bf16.mxu0 0
    %442 = vmatpush2.bf16.msra.mxu0 0
    %443 = vmatprep.subr.bf16.mxu0 0
    %444 = vmatpush2.bf16.msra.mxu0 0
    %445 = vmatprep.subr.bf16.mxu0 0
    %446 = vmatpush2.bf16.msra.mxu0 0
    %447 = vmatprep.subr.bf16.mxu0 0
    %448 = vmatpush2.bf16.msra.mxu0 0
    %449 = vmatprep.subr.bf16.mxu0 0
    %450 = vmatpush2.bf16.msra.mxu0 0
    %451 = vmatprep.subr.bf16.mxu0 0
    %452 = vmatpush2.bf16.msra.mxu0 0
    %453 = vmatprep.subr.bf16.mxu0 0
    %454 = vmatpush2.bf16.msra.mxu0 0
    %455 = vmatprep.subr.bf16.mxu0 0
    %456 = vmatpush2.bf16.msra.mxu0 0
    %457 = vmatprep.mubr.bf16.mxu0 0
    %458 = vmatmul.mubr.bf16.gmra.mxu0 %v423
    %v459 = vpop.f32.mrf.mxu0
    %v460 = vadd.f32 %v420, %v459
    %v461 = vpop.f32.mrf.mxu0
    %v462 = vpop.f32.mrf.mxu0
    %v463 = vpop.f32.mrf.mxu0
    %464 = vdwg.mxu0
    %v465 = vmul.f32 %v460, %v180
    %v466 = vtanh.pop %v465
    %v467 = vmul.f32 %v466, %v180
    %v468 = vadd.f32 %v467, %v181
    %v469 = vmul.f32 %v468, %v404
    %471 = vrot.lane.b32.xlu0 %v468, 64
    %v472 = vpop.permute.xlu0 %471
    %v474 = vmul.f32 %v468, %v472
    %476 = vrot.lane.b32.xlu0 %v474, 32
    %v477 = vpop.permute.xlu0 %476
    %v479 = vadd.f32 %v469, %v477
    %v480 = vtanh.pop %v479
    %482 = vrot.lane.b32.xlu0 %v480, 64
    %v483 = vpop.permute.xlu0 %482
    %v485 = vmul.f32 %v468, %v483
    %487 = vrot.lane.b32.xlu0 %v485, 32
    %v488 = vpop.permute.xlu0 %487
    %490 = vst.msk [vmem:[#allocation2 + $0x6] sm:$0x3] %vm263, %v488
    %v491 = vpack.c.bf16 %v485, %v485
    %493 = vrot.lane.b32.xlu0 %v491, 32
    %v494 = vpop.permute.xlu0 %493
    %v496 = vsel %vm194, %v494, 0
    %498 = vmatprep.subr.bf16.mxu0 0
    %499 = vmatpush1.bf16.msra.mxu0 0
    %500 = vmatprep.subr.bf16.mxu0 0
    %501 = vmatpush1.bf16.msra.mxu0 0
    %502 = vmatprep.subr.bf16.mxu0 0
    %503 = vmatpush1.bf16.msra.mxu0 0
    %504 = vmatprep.subr.bf16.mxu0 0
    %505 = vmatpush1.bf16.msra.mxu0 0
    %506 = vmatprep.subr.bf16.mxu0 0
    %507 = vmatpush1.bf16.msra.mxu0 0
    %508 = vmatprep.subr.bf16.mxu0 0
    %509 = vmatpush1.bf16.msra.mxu0 0
    %510 = vmatprep.subr.bf16.mxu0 0
    %511 = vmatpush1.bf16.msra.mxu0 %v191
    %512 = vmatprep.subr.bf16.mxu0 0
    %513 = vmatpush1.bf16.msra.mxu0 %v190
    %514 = vmatprep.subr.bf16.mxu0 0
    %515 = vmatpush2.bf16.msra.mxu0 0
    %516 = vmatprep.subr.bf16.mxu0 0
    %517 = vmatpush2.bf16.msra.mxu0 0
    %518 = vmatprep.subr.bf16.mxu0 0
    %519 = vmatpush2.bf16.msra.mxu0 0
    %520 = vmatprep.subr.bf16.mxu0 0
    %521 = vmatpush2.bf16.msra.mxu0 0
    %522 = vmatprep.subr.bf16.mxu0 0
    %523 = vmatpush2.bf16.msra.mxu0 0
    %524 = vmatprep.subr.bf16.mxu0 0
    %525 = vmatpush2.bf16.msra.mxu0 0
    %526 = vmatprep.subr.bf16.mxu0 0
    %527 = vmatpush2.bf16.msra.mxu0 0
    %528 = vmatprep.subr.bf16.mxu0 0
    %529 = vmatpush2.bf16.msra.mxu0 0
    %530 = vmatprep.mubr.bf16.mxu0 0
    %531 = vmatmul.mubr.bf16.gmra.mxu0 %v496
    %v532 = vpop.f32.mrf.mxu0
    %v533 = vadd.f32 %v172, %v532
    %v534 = vpop.f32.mrf.mxu0
    %v535 = vpop.f32.mrf.mxu0
    %v536 = vpop.f32.mrf.mxu0
    %537 = vdwg.mxu0
    %v538 = vmul.f32 %v533, %v180
    %v539 = vtanh.pop %v538
    %v540 = vmul.f32 %v539, %v180
    %v541 = vadd.f32 %v540, %v181
    %v542 = vmul.f32 %v541, %v479
    %544 = vrot.lane.b32.xlu0 %v541, 64
    %v545 = vpop.permute.xlu0 %544
    %v547 = vmul.f32 %v541, %v545
    %549 = vrot.lane.b32.xlu0 %v547, 32
    %v550 = vpop.permute.xlu0 %549
    %v552 = vadd.f32 %v542, %v550
    %v553 = vtanh.pop %v552
    %555 = vrot.lane.b32.xlu0 %v553, 64
    %v556 = vpop.permute.xlu0 %555
    %v558 = vmul.f32 %v541, %v556
    %560 = vrot.lane.b32.xlu0 %v558, 32
    %v561 = vpop.permute.xlu0 %560
    %563 = vst.msk [vmem:[#allocation2 + $0x8] sm:$0x3] %vm263, %v561
    %v564 = vpack.c.bf16 %v558, %v558
    %566 = vrot.lane.b32.xlu0 %v564, 32
    %v567 = vpop.permute.xlu0 %566
    %v569 = vrot.slane %v172, 2
    %v572 = vsel %vm194, %v567, 0
    %574 = vmatprep.subr.bf16.mxu0 0
    %575 = vmatpush1.bf16.msra.mxu0 0
    %576 = vmatprep.subr.bf16.mxu0 0
    %577 = vmatpush1.bf16.msra.mxu0 0
    %578 = vmatprep.subr.bf16.mxu0 0
    %579 = vmatpush1.bf16.msra.mxu0 0
    %580 = vmatprep.subr.bf16.mxu0 0
    %581 = vmatpush1.bf16.msra.mxu0 0
    %582 = vmatprep.subr.bf16.mxu0 0
    %583 = vmatpush1.bf16.msra.mxu0 0
    %584 = vmatprep.subr.bf16.mxu0 0
    %585 = vmatpush1.bf16.msra.mxu0 0
    %586 = vmatprep.subr.bf16.mxu0 0
    %587 = vmatpush1.bf16.msra.mxu0 %v191
    %588 = vmatprep.subr.bf16.mxu0 0
    %589 = vmatpush1.bf16.msra.mxu0 %v190
    %590 = vmatprep.subr.bf16.mxu0 0
    %591 = vmatpush2.bf16.msra.mxu0 0
    %592 = vmatprep.subr.bf16.mxu0 0
    %593 = vmatpush2.bf16.msra.mxu0 0
    %594 = vmatprep.subr.bf16.mxu0 0
    %595 = vmatpush2.bf16.msra.mxu0 0
    %596 = vmatprep.subr.bf16.mxu0 0
    %597 = vmatpush2.bf16.msra.mxu0 0
    %598 = vmatprep.subr.bf16.mxu0 0
    %599 = vmatpush2.bf16.msra.mxu0 0
    %600 = vmatprep.subr.bf16.mxu0 0
    %601 = vmatpush2.bf16.msra.mxu0 0
    %602 = vmatprep.subr.bf16.mxu0 0
    %603 = vmatpush2.bf16.msra.mxu0 0
    %604 = vmatprep.subr.bf16.mxu0 0
    %605 = vmatpush2.bf16.msra.mxu0 0
    %606 = vmatprep.mubr.bf16.mxu0 0
    %607 = vmatmul.mubr.bf16.gmra.mxu0 %v572
    %v608 = vpop.f32.mrf.mxu0
    %v609 = vadd.f32 %v569, %v608
    %v610 = vpop.f32.mrf.mxu0
    %v611 = vpop.f32.mrf.mxu0
    %v612 = vpop.f32.mrf.mxu0
    %613 = vdwg.mxu0
    %v614 = vmul.f32 %v609, %v180
    %v615 = vtanh.pop %v614
    %v616 = vmul.f32 %v615, %v180
    %v617 = vadd.f32 %v616, %v181
    %v618 = vmul.f32 %v617, %v552
    %620 = vrot.lane.b32.xlu0 %v617, 64
    %v621 = vpop.permute.xlu0 %620
    %v623 = vmul.f32 %v617, %v621
    %625 = vrot.lane.b32.xlu0 %v623, 32
    %v626 = vpop.permute.xlu0 %625
    %v628 = vadd.f32 %v618, %v626
    %v629 = vtanh.pop %v628
    %631 = vrot.lane.b32.xlu0 %v629, 64
    %v632 = vpop.permute.xlu0 %631
    %v634 = vmul.f32 %v617, %v632
    %636 = vrot.lane.b32.xlu0 %v634, 32
    %v637 = vpop.permute.xlu0 %636
    %639 = vst.msk [vmem:[#allocation2 + $0xa] sm:$0x3] %vm263, %v637
    %v640 = vpack.c.bf16 %v634, %v634
    %642 = vrot.lane.b32.xlu0 %v640, 32
    %v643 = vpop.permute.xlu0 %642
    %v644 = vrot.slane %v172, 4
    %v647 = vsel %vm194, %v643, 0
    %649 = vmatprep.subr.bf16.mxu0 0
    %650 = vmatpush1.bf16.msra.mxu0 0
    %651 = vmatprep.subr.bf16.mxu0 0
    %652 = vmatpush1.bf16.msra.mxu0 0
    %653 = vmatprep.subr.bf16.mxu0 0
    %654 = vmatpush1.bf16.msra.mxu0 0
    %655 = vmatprep.subr.bf16.mxu0 0
    %656 = vmatpush1.bf16.msra.mxu0 0
    %657 = vmatprep.subr.bf16.mxu0 0
    %658 = vmatpush1.bf16.msra.mxu0 0
    %659 = vmatprep.subr.bf16.mxu0 0
    %660 = vmatpush1.bf16.msra.mxu0 0
    %661 = vmatprep.subr.bf16.mxu0 0
    %662 = vmatpush1.bf16.msra.mxu0 %v191
    %663 = vmatprep.subr.bf16.mxu0 0
    %664 = vmatpush1.bf16.msra.mxu0 %v190
    %665 = vmatprep.subr.bf16.mxu0 0
    %666 = vmatpush2.bf16.msra.mxu0 0
    %667 = vmatprep.subr.bf16.mxu0 0
    %668 = vmatpush2.bf16.msra.mxu0 0
    %669 = vmatprep.subr.bf16.mxu0 0
    %670 = vmatpush2.bf16.msra.mxu0 0
    %671 = vmatprep.subr.bf16.mxu0 0
    %672 = vmatpush2.bf16.msra.mxu0 0
    %673 = vmatprep.subr.bf16.mxu0 0
    %674 = vmatpush2.bf16.msra.mxu0 0
    %675 = vmatprep.subr.bf16.mxu0 0
    %676 = vmatpush2.bf16.msra.mxu0 0
    %677 = vmatprep.subr.bf16.mxu0 0
    %678 = vmatpush2.bf16.msra.mxu0 0
    %679 = vmatprep.subr.bf16.mxu0 0
    %680 = vmatpush2.bf16.msra.mxu0 0
    %681 = vmatprep.mubr.bf16.mxu0 0
    %682 = vmatmul.mubr.bf16.gmra.mxu0 %v647
    %v683 = vpop.f32.mrf.mxu0
    %v684 = vadd.f32 %v644, %v683
    %v685 = vpop.f32.mrf.mxu0
    %v686 = vpop.f32.mrf.mxu0
    %v687 = vpop.f32.mrf.mxu0
    %688 = vdwg.mxu0
    %v689 = vmul.f32 %v684, %v180
    %v690 = vtanh.pop %v689
    %v691 = vmul.f32 %v690, %v180
    %v692 = vadd.f32 %v691, %v181
    %v693 = vmul.f32 %v692, %v628
    %695 = vrot.lane.b32.xlu0 %v692, 64
    %v696 = vpop.permute.xlu0 %695
    %v698 = vmul.f32 %v692, %v696
    %700 = vrot.lane.b32.xlu0 %v698, 32
    %v701 = vpop.permute.xlu0 %700
    %v703 = vadd.f32 %v693, %v701
    %v704 = vtanh.pop %v703
    %706 = vrot.lane.b32.xlu0 %v704, 64
    %v707 = vpop.permute.xlu0 %706
    %v709 = vmul.f32 %v692, %v707
    %711 = vrot.lane.b32.xlu0 %v709, 32
    %v712 = vpop.permute.xlu0 %711
    %714 = vst.msk [vmem:[#allocation2 + $0xc] sm:$0x3] %vm263, %v712
    %v715 = vpack.c.bf16 %v709, %v709
    %717 = vrot.lane.b32.xlu0 %v715, 32
    %v718 = vpop.permute.xlu0 %717
    %v719 = vrot.slane %v172, 6
    %v722 = vsel %vm194, %v718, 0
    %724 = vmatprep.subr.bf16.mxu0 0
    %725 = vmatpush1.bf16.msra.mxu0 0
    %726 = vmatprep.subr.bf16.mxu0 0
    %727 = vmatpush1.bf16.msra.mxu0 0
    %728 = vmatprep.subr.bf16.mxu0 0
    %729 = vmatpush1.bf16.msra.mxu0 0
    %730 = vmatprep.subr.bf16.mxu0 0
    %731 = vmatpush1.bf16.msra.mxu0 0
    %732 = vmatprep.subr.bf16.mxu0 0
    %733 = vmatpush1.bf16.msra.mxu0 0
    %734 = vmatprep.subr.bf16.mxu0 0
    %735 = vmatpush1.bf16.msra.mxu0 0
    %736 = vmatprep.subr.bf16.mxu0 0
    %737 = vmatpush1.bf16.msra.mxu0 %v191
    %738 = vmatprep.subr.bf16.mxu0 0
    %739 = vmatpush1.bf16.msra.mxu0 %v190
    %740 = vmatprep.subr.bf16.mxu0 0
    %741 = vmatpush2.bf16.msra.mxu0 0
    %742 = vmatprep.subr.bf16.mxu0 0
    %743 = vmatpush2.bf16.msra.mxu0 0
    %744 = vmatprep.subr.bf16.mxu0 0
    %745 = vmatpush2.bf16.msra.mxu0 0
    %746 = vmatprep.subr.bf16.mxu0 0
    %747 = vmatpush2.bf16.msra.mxu0 0
    %748 = vmatprep.subr.bf16.mxu0 0
    %749 = vmatpush2.bf16.msra.mxu0 0
    %750 = vmatprep.subr.bf16.mxu0 0
    %751 = vmatpush2.bf16.msra.mxu0 0
    %752 = vmatprep.subr.bf16.mxu0 0
    %753 = vmatpush2.bf16.msra.mxu0 0
    %754 = vmatprep.subr.bf16.mxu0 0
    %755 = vmatpush2.bf16.msra.mxu0 0
    %756 = vmatprep.mubr.bf16.mxu0 0
    %757 = vmatmul.mubr.bf16.gmra.mxu0 %v722
    %v758 = vpop.f32.mrf.mxu0
    %v759 = vadd.f32 %v719, %v758
    %v760 = vpop.f32.mrf.mxu0
    %v761 = vpop.f32.mrf.mxu0
    %v762 = vpop.f32.mrf.mxu0
    %763 = vdwg.mxu0
    %v764 = vmul.f32 %v759, %v180
    %v765 = vtanh.pop %v764
    %v766 = vmul.f32 %v765, %v180
    %v767 = vadd.f32 %v766, %v181
    %v768 = vmul.f32 %v767, %v703
    %770 = vrot.lane.b32.xlu0 %v767, 64
    %v771 = vpop.permute.xlu0 %770
    %v773 = vmul.f32 %v767, %v771
    %775 = vrot.lane.b32.xlu0 %v773, 32
    %v776 = vpop.permute.xlu0 %775
    %v778 = vadd.f32 %v768, %v776
    %v779 = vtanh.pop %v778
    %781 = vrot.lane.b32.xlu0 %v779, 64
    %v782 = vpop.permute.xlu0 %781
    %v784 = vmul.f32 %v767, %v782
    %786 = vrot.lane.b32.xlu0 %v784, 32
    %v787 = vpop.permute.xlu0 %786
    %789 = vst.msk [vmem:[#allocation2 + $0xe] sm:$0x3] %vm263, %v787
    %v790 = vld [vmem:[#allocation2] sm:$0xff]
    %v791 = vld [vmem:[#allocation2 + $0x8] sm:$0xff]
    %v792 = vpack.c.bf16 %v791, %v790
    %v793 = vld [vmem:[#allocation9] sm:$0xf]
    %v794 = vld [vmem:[#allocation9 + $0x4] sm:$0xf]
    %v795 = vld [vmem:[#allocation9 + $0x8] sm:$0xf]
    %v796 = vld [vmem:[#allocation9 + $0xc] sm:$0xf]
    %v797 = vld [vmem:[%s5] sm:$0x1]
    %v799 = vlaneseq
    %v800 = vshrl.u32 %v799, 7
    %v801 = vsub.s32 0, %v800
    %v802 = vrot.slane %v797, %v801
    %v808 = vunpack.c.l.b16 %v793
    %v809 = vunpack.c.l.b16 %v794
    %v810 = vunpack.c.l.b16 %v795
    %v811 = vunpack.c.l.b16 %v796
    %v812 = vpack.c.b16 %v809, %v808
    %v813 = vpack.c.b16 %v811, %v810
    %v817 = vsel %vm194, %v792, 0
    %819 = vmatprep.subr.bf16.mxu0 0
    %820 = vmatpush1.bf16.msra.mxu0 0
    %821 = vmatprep.subr.bf16.mxu0 0
    %822 = vmatpush1.bf16.msra.mxu0 0
    %823 = vmatprep.subr.bf16.mxu0 0
    %824 = vmatpush1.bf16.msra.mxu0 0
    %825 = vmatprep.subr.bf16.mxu0 0
    %826 = vmatpush1.bf16.msra.mxu0 0
    %827 = vmatprep.subr.bf16.mxu0 0
    %828 = vmatpush1.bf16.msra.mxu0 0
    %829 = vmatprep.subr.bf16.mxu0 0
    %830 = vmatpush1.bf16.msra.mxu0 0
    %831 = vmatprep.subr.bf16.mxu0 0
    %832 = vmatpush1.bf16.msra.mxu0 %v813
    %833 = vmatprep.subr.bf16.mxu0 0
    %834 = vmatpush1.bf16.msra.mxu0 %v812
    %835 = vmatprep.subr.bf16.mxu0 0
    %836 = vmatpush2.bf16.msra.mxu0 0
    %837 = vmatprep.subr.bf16.mxu0 0
    %838 = vmatpush2.bf16.msra.mxu0 0
    %839 = vmatprep.subr.bf16.mxu0 0
    %840 = vmatpush2.bf16.msra.mxu0 0
    %841 = vmatprep.subr.bf16.mxu0 0
    %842 = vmatpush2.bf16.msra.mxu0 0
    %843 = vmatprep.subr.bf16.mxu0 0
    %844 = vmatpush2.bf16.msra.mxu0 0
    %845 = vmatprep.subr.bf16.mxu0 0
    %846 = vmatpush2.bf16.msra.mxu0 0
    %847 = vmatprep.subr.bf16.mxu0 0
    %848 = vmatpush2.bf16.msra.mxu0 0
    %849 = vmatprep.subr.bf16.mxu0 0
    %850 = vmatpush2.bf16.msra.mxu0 0
    %851 = vmatprep.mubr.bf16.mxu0 0
    %852 = vmatmul.mubr.bf16.gmra.mxu0 %v817
    %v853 = vpop.f32.mrf.mxu0
    %v854 = vadd.f32 %v802, %v853
    %v855 = vpop.f32.mrf.mxu0
    %v856 = vpop.f32.mrf.mxu0
    %v857 = vadd.f32 %v802, %v856
    %v858 = vpop.f32.mrf.mxu0
    %859 = vdwg.mxu0
    %v860 = vmax.f32 %v854, 0.0
    %v861 = vmax.f32 %v857, 0.0
    %vm862 = vcmp.lt.s32.totalorder %v176, 8
    %v863 = vsel %vm862, %v860, -1e+30
    %v864 = vsel %vm862, %v861, -1e+30
    %865 = vmax.xlane.f32.xlu0 %v863
    %v866 = vpop.xlane.xlu0 %865
    %867 = vmax.xlane.f32.xlu0 %v864
    %v868 = vpop.xlane.xlu0 %867
    %v869 = vsub.f32 %v863, %v866
    %v870 = vsub.f32 %v864, %v868
    %v871 = vmul.f32 %v869, 1.442695
    %v872 = vpow.pop %v871
    %v873 = vmul.f32 %v870, 1.442695
    %v874 = vpow.pop %v873
    %875 = vadd.xlane.f32.xlu0 %v872
    %v876 = vpop.xlane.xlu0 %875
    %877 = vadd.xlane.f32.xlu0 %v874
    %v878 = vpop.xlane.xlu0 %877
    %v879 = vlog2.pop %v876
    %v880 = vmul.f32 %v879, 0.6931472
    %v881 = vlog2.pop %v878
    %v882 = vmul.f32 %v881, 0.6931472
    %v883 = vadd.f32 %v866, %v880
    %v884 = vadd.f32 %v868, %v882
    %v885 = vsub.f32 %v863, %v883
    %v886 = vsub.f32 %v864, %v884
    %887 = vst [vmem:[#allocation11] sm:$0xff] %v885
    %888 = vst [vmem:[#allocation11 + $0x8] sm:$0xff] %v886
    // Predicated region
    $region42: #{tpu_custom_call.1} parent=1 // pred_check
      _
    $region43: #{tpu_custom_call.1} parent=1 // pred_check_branch
      %890 = sbr.rel (0) target = $region45
    $region44: #{tpu_custom_call.1} parent=1 // pred_region
      %s892 = ssub.s32 256, 256
      %893 = vsyncadd [#allocation5], %s892
      %s894 = sshll.u32 [#allocation11], 4
      %s895 = int_to_ptr.vmem [resolvable:$true] %s894
      %900 = dma.vmem_to_hbm [thread:$0]  %s895, 256, %s6, [#allocation5], 128, 128, 8
    $region45: #{tpu_custom_call.1} parent=1 // pred_fallthru
      _
    // Predicated region
    $region46: #{tpu_custom_call.1} parent=1 // pred_check
      _
    $region47: #{tpu_custom_call.1} parent=1 // pred_check_branch
      %902 = sbr.rel (0) target = $region49
    $region48: #{tpu_custom_call.1} parent=1 // pred_region
      %903 = dma.done [#allocation5], 256
    $region49: #{tpu_custom_call.1} parent=1 // pred_fallthru
      _
    %904 = vsyncpa [#allocation4], 1
    %905 = vsyncpa [#allocation7], 1
    %906 = vsyncpa [#allocation10], 1
    %907 = vsyncpa [#allocation5], 1

</llo_original>
